<compile_context>
chip_gen: v6e
topology: v6e:2x2x1
jax: 0.10.0
libtpu: 0.0.40
codegen_flags: <defaults>
</compile_context>

<pallas_src>
import functools

import jax
import jax.numpy as jnp
import numpy as np
from jax.experimental import pallas as pl
from jax.experimental.pallas import tpu as pltpu


def _sh_block_kernel(params_ref, sv_ref, x_ref, o_ref, *, use_max, use_avg, kk):
    # params_ref: (2,) f32 in SMEM -> [weight, bias]
    # sv_ref: (2*kk, TN)  sublanes 0..kk-1   = saturation-channel window elems
    #                     sublanes kk..2kk-1 = value-channel window elems
    # x_ref / o_ref: (C, TN)
    w = params_ref[0]
    b = params_ref[1]

    sv = sv_ref[...].astype(jnp.float32)                 # (2*kk, TN)
    s = sv[:kk, :]                                       # saturation patch elems
    v = sv[kk:, :]                                       # value patch elems
    hl = jax.nn.sigmoid(w * ((1.0 - s) * v) + b)         # (kk, TN), f32 / EUP

    terms = []
    if use_max:
        terms.append(jnp.max(hl, axis=0, keepdims=True))           # sublane reduce
    if use_avg:
        terms.append(jnp.sum(hl, axis=0, keepdims=True) * (1.0 / kk))
    if terms:
        att = terms[0]
        for t in terms[1:]:
            att = att + t
    else:
        att = jnp.zeros((1, hl.shape[1]), jnp.float32)

    # (C, TN) * (1, TN): broadcast along sublanes == channel repeat.
    # Multiply in x's dtype (bf16 stays bf16 on v6e/v7x); pooling stayed f32.
    x = x_ref[...]
    o_ref[...] = (x * att.astype(x.dtype)).astype(o_ref.dtype)


@functools.partial(jax.jit, static_argnames=("pooling_size", "pool_type"))
def sh_block(x, sv, weight, bias, pooling_size, pool_type=('max', 'avg')):
    """x: (B, C, H//k, W//k), sv: (B, 2, H, W) -> (B, C, H//k, W//k)."""
    B, C, h, w = x.shape
    Bs, two, H, W = sv.shape
    k = int(pooling_size)
    assert Bs == B and two == 2
    assert h == H // k and w == W // k, "x spatial must equal pooled sv spatial"

    kk = k * k
    HW = h * w

    # ---- layout plumbing --------------------------------------------------
    # x / out: free reshape views of the native NCHW layout (no HBM pass).
    x_v = x.reshape(B, C, HW)

    # sv: gather each k*k pooling window onto the sublane axis, pooled spatial
    # positions onto a lane-dense axis.  One XLA transpose pass over sv, kept
    # in the *native* dtype (no f32 upcast in the wrapper).
    # TODO(synk): fold this rearrangement into the kernel (in-kernel k-row /
    # k-column window reduction over native (B,2,H,W)) to drop this HBM pass.
    sv_c = sv[:, :, :h * k, :w * k]
    sv_p = sv_c.reshape(B, 2, h, k, w, k).transpose(0, 1, 3, 5, 2, 4)
    sv_p = sv_p.reshape(B, 2 * kk, HW)                   # (B, 2kk, HW)

    params = jnp.concatenate(
        [jnp.reshape(weight, (1,)), jnp.reshape(bias, (1,))]).astype(jnp.float32)

    # ---- lane tiling: largest multiple-of-128 tile within a VMEM budget ----
    sv_bytes = sv.dtype.itemsize
    x_bytes = x.dtype.itemsize
    bytes_per_lane = 2 * kk * sv_bytes + 2 * C * x_bytes      # sv + x + out
    budget = 8 * 1024 * 1024                                  # double-buffered blocks
    tn_cap = max(128, (budget // (2 * bytes_per_lane) // 128) * 128)
    if HW >= 128:
        TN = min((HW // 128) * 128, tn_cap)
    else:
        TN = HW                                               # full-dim block is legal
    # Keep the grid >= 2 steps when possible (v7x megacore: 2 TensorCores).
    if B == 1 and HW >= 2 * 128:
        TN = min(TN, ((HW + 2 * 128 - 1) // (2 * 128)) * 128)

    grid = (B, pl.cdiv(HW, TN))

    kernel = functools.partial(
        _sh_block_kernel,
        use_max=('max' in pool_type),
        use_avg=('avg' in pool_type),
        kk=kk)

    n_full = B * HW
    cost = pl.CostEstimate(
        flops=int(n_full * (6 * kk + C)),
        transcendentals=int(n_full * kk),
        bytes_accessed=int(2 * kk * n_full * sv_bytes + 2 * C * n_full * x_bytes))

    out_v = pl.pallas_call(
        kernel,
        out_shape=jax.ShapeDtypeStruct((B, C, HW), x.dtype),
        grid=grid,
        in_specs=[
            pl.BlockSpec(memory_space=pltpu.MemorySpace.SMEM),          # [weight, bias]
            pl.BlockSpec((None, 2 * kk, TN), lambda b, n: (b, 0, n)),   # sv windows
            pl.BlockSpec((None, C, TN), lambda b, n: (b, 0, n)),        # x
        ],
        out_specs=pl.BlockSpec((None, C, TN), lambda b, n: (b, 0, n)),
        compiler_params=pltpu.CompilerParams(
            dimension_semantics=("parallel", "parallel"),
            vmem_limit_bytes=32 * 1024 * 1024),
        cost_estimate=cost,
    )(params, sv_p, x_v)

    return out_v.reshape(B, C, h, w)


def _reference(x, sv, weight, bias, pooling_size, pool_type=('max', 'avg')):
    """Pure-JAX (f32) mirror of the PyTorch SH_Block forward."""
    k = int(pooling_size)
    B, _, H, W = sv.shape
    h, w = H // k, W // k
    sv32 = sv.astype(jnp.float32)
    sat = 1.0 - sv32[:, 0:1]
    val = sv32[:, 1:2]
    hl = jax.nn.sigmoid(weight.astype(jnp.float32) * (sat * val)
                        + bias.astype(jnp.float32))               # (B,1,H,W)
    hl_p = hl[:, :, :h * k, :w * k].reshape(B, 1, h, k, w, k)
    att = jnp.zeros((B, 1, h, w), jnp.float32)
    if 'max' in pool_type:
        att = att + hl_p.max(axis=(3, 5))
    if 'avg' in pool_type:
        att = att + hl_p.mean(axis=(3, 5))
    return x.astype(jnp.float32) * att


if __name__ == "__main__":
    key = jax.random.PRNGKey(0)
    k1, k2, k3, k4 = jax.random.split(key, 4)

    weight = jnp.array([1.0], jnp.float32)   # nn.Parameter init
    bias = jnp.array([0.0], jnp.float32)     # nn.Parameter init

    # --- test 1: f32 inputs, lane width < 128 (full-dim block path) --------
    planes, pooling_size = 4, 2
    B, H, W = 2, 16, 16
    h, w = H // pooling_size, W // pooling_size
    sv = jax.random.uniform(k1, (B, 2, H, W), dtype=jnp.float32)   # S/V in [0,1)
    x = jax.random.normal(k2, (B, planes, h, w), dtype=jnp.float32)

    out = sh_block(x, sv, weight, bias, pooling_size=pooling_size)
    jax.block_until_ready(out)
    ref = _reference(x, sv, weight, bias, pooling_size)
    np.testing.assert_allclose(np.asarray(out), np.asarray(ref),
                               rtol=1e-5, atol=1e-5)

    # --- test 2: bf16 inputs, h*w not a multiple of 128 (masked boundary) --
    B2, H2, W2 = 2, 24, 24
    h2, w2 = H2 // pooling_size, W2 // pooling_size
    sv2 = jax.random.uniform(k3, (B2, 2, H2, W2),
                             dtype=jnp.float32).astype(jnp.bfloat16)
    x2 = jax.random.normal(k4, (B2, planes, h2, w2),
                           dtype=jnp.float32).astype(jnp.bfloat16)

    out2 = sh_block(x2, sv2, weight, bias, pooling_size=pooling_size)
    jax.block_until_ready(out2)
    ref2 = _reference(x2, sv2, weight, bias, pooling_size)
    np.testing.assert_allclose(np.asarray(out2).astype(np.float32),
                               np.asarray(ref2), rtol=3e-2, atol=3e-2)

    print("KERNEL_OK")
</pallas_src>

<mosaic_0001>
module attributes {stable_mosaic.version = 11 : i64} {
  func.func @_sh_block_kernel(%arg0: i32, %arg1: i32, %arg2: memref<2xf32, #tpu.memory_space<smem>>, %arg3: memref<1x8x64xf32, #tpu.memory_space<vmem>>, %arg4: memref<1x4x64xf32, #tpu.memory_space<vmem>>, %arg5: memref<1x4x64xf32, #tpu.memory_space<vmem>>) attributes {dimension_semantics = [#tpu.dimension_semantics<parallel>, #tpu.dimension_semantics<parallel>], iteration_bounds = array<i64: 2, 1>, scalar_prefetch = 0 : i64, scratch_operands = 0 : i64, tpu.core_type = #tpu.core_type<tc>, window_params = [{transform_indices = @transform_0, window_bounds = array<i64: 2>}, {transform_indices = @transform_1, window_bounds = array<i64: 1, 8, 64>}, {transform_indices = @transform_2, window_bounds = array<i64: 1, 4, 64>}, {transform_indices = @transform_3, window_bounds = array<i64: 1, 4, 64>}]} {
    %c0 = arith.constant 0 : index
    %0 = memref.load %arg2[%c0] : memref<2xf32, #tpu.memory_space<smem>>
    %c1 = arith.constant 1 : index
    %1 = memref.load %arg2[%c1] : memref<2xf32, #tpu.memory_space<smem>>
    %c0_0 = arith.constant 0 : index
    %c0_1 = arith.constant 0 : index
    %c0_2 = arith.constant 0 : index
    %2 = vector.load %arg3[%c0_0, %c0_1, %c0_2] : memref<1x8x64xf32, #tpu.memory_space<vmem>>, vector<1x8x64xf32>
    %3 = vector.shape_cast %2 : vector<1x8x64xf32> to vector<8x64xf32>
    %4 = vector.extract_strided_slice %3 {offsets = [0, 0], sizes = [4, 64], strides = [1, 1]} : vector<8x64xf32> to vector<4x64xf32>
    %5 = vector.extract_strided_slice %3 {offsets = [4, 0], sizes = [4, 64], strides = [1, 1]} : vector<8x64xf32> to vector<4x64xf32>
    %cst = arith.constant 1.000000e+00 : f32
    %6 = vector.broadcast %cst : f32 to vector<4x64xf32>
    %7 = arith.subf %6, %4 : vector<4x64xf32>
    %8 = arith.mulf %7, %5 : vector<4x64xf32>
    %9 = vector.broadcast %0 : f32 to vector<4x64xf32>
    %10 = arith.mulf %9, %8 : vector<4x64xf32>
    %11 = vector.broadcast %1 : f32 to vector<4x64xf32>
    %12 = arith.addf %10, %11 : vector<4x64xf32>
    %13 = arith.negf %12 : vector<4x64xf32>
    %14 = math.exp %13 : vector<4x64xf32>
    %cst_3 = arith.constant 1.000000e+00 : f32
    %15 = vector.broadcast %cst_3 : f32 to vector<4x64xf32>
    %16 = arith.addf %15, %14 : vector<4x64xf32>
    %17 = arith.divf %15, %16 : vector<4x64xf32>
    %cst_4 = arith.constant dense<0xFF800000> : vector<64xf32>
    %18 = vector.multi_reduction <maximumf>, %17, %cst_4 [0] : vector<4x64xf32> to vector<64xf32>
    %19 = vector.shape_cast %18 : vector<64xf32> to vector<1x64xf32>
    %cst_5 = arith.constant dense<0.000000e+00> : vector<64xf32>
    %20 = vector.multi_reduction <add>, %17, %cst_5 [0] : vector<4x64xf32> to vector<64xf32>
    %21 = vector.shape_cast %20 : vector<64xf32> to vector<1x64xf32>
    %cst_6 = arith.constant 2.500000e-01 : f32
    %22 = vector.broadcast %cst_6 : f32 to vector<1x64xf32>
    %23 = arith.mulf %21, %22 : vector<1x64xf32>
    %24 = arith.addf %19, %23 : vector<1x64xf32>
    %c0_7 = arith.constant 0 : index
    %c0_8 = arith.constant 0 : index
    %c0_9 = arith.constant 0 : index
    %25 = vector.load %arg4[%c0_7, %c0_8, %c0_9] : memref<1x4x64xf32, #tpu.memory_space<vmem>>, vector<1x4x64xf32>
    %26 = vector.shape_cast %25 : vector<1x4x64xf32> to vector<4x64xf32>
    %27 = vector.broadcast %24 : vector<1x64xf32> to vector<4x64xf32>
    %28 = arith.mulf %26, %27 : vector<4x64xf32>
    %c0_10 = arith.constant 0 : index
    %c0_11 = arith.constant 0 : index
    %c0_12 = arith.constant 0 : index
    %29 = vector.load %arg5[%c0_10, %c0_11, %c0_12] : memref<1x4x64xf32, #tpu.memory_space<vmem>>, vector<1x4x64xf32>
    %30 = vector.shape_cast %29 : vector<1x4x64xf32> to vector<4x64xf32>
    %31 = vector.shape_cast %28 : vector<4x64xf32> to vector<1x4x64xf32>
    tpu.vector_store %arg5[%c0_10, %c0_11, %c0_12], %31 {strides = array<i32>} : memref<1x4x64xf32, #tpu.memory_space<vmem>>, vector<1x4x64xf32>,
    return
  }
  func.func @transform_0(%arg0: i32, %arg1: i32) -> i32 {
    %c0_i32 = arith.constant 0 : i32
    %c0_i32_0 = arith.constant 0 : i32
    return %c0_i32 : i32
  }
  func.func @transform_1(%arg0: i32, %arg1: i32) -> (i32, i32, i32) {
    %c0_i32 = arith.constant 0 : i32
    %c0_i32_0 = arith.constant 0 : i32
    return %arg0, %c0_i32, %arg1 : i32, i32, i32
  }
  func.func @transform_2(%arg0: i32, %arg1: i32) -> (i32, i32, i32) {
    %c0_i32 = arith.constant 0 : i32
    %c0_i32_0 = arith.constant 0 : i32
    return %arg0, %c0_i32, %arg1 : i32, i32, i32
  }
  func.func @transform_3(%arg0: i32, %arg1: i32) -> (i32, i32, i32) {
    %c0_i32 = arith.constant 0 : i32
    %c0_i32_0 = arith.constant 0 : i32
    return %arg0, %c0_i32, %arg1 : i32, i32, i32
  }
}

</mosaic_0001>

<llo_original>
// kernel: sh_block.1
$region0: #{sh_block.1}
  #allocation0 [shape = 'u32[]', space=smem, size = 0x4, offset = 0x4, fixed_abs, tag = 'smem constant byte address 0x4 - core index']
  #allocation1 [shape = 'u32[144,128]{1,0:T(1,128)}', space=vmem, size = 0x12000, scoped, tag = 'internal scratch']
  %s0 = inlined_call_operand.vmem [shape: f32[2], index: 0, kind: input, shape index: {}]
  %s1 = inlined_call_operand.vmem [shape: f32[2,8,64], index: 1, kind: input, shape index: {}]
  %s2 = inlined_call_operand.vmem [shape: f32[2,4,64], index: 2, kind: input, shape index: {}]
  %s3 = inlined_call_operand.vmem [shape: f32[2,4,64], index: 3, kind: output, shape index: {}]
  %s4 = sld [smem:[#allocation0]]
  $region49: #{sh_block.1} parent=0
    _
  %s6 = ssub.s32 1, %s4
  %s7 = scalar_select 0, %s6, %s4
  $region1: #{sh_block.1} parent=0
    #allocation2 [shape = 'u8[512]{0}', space=smem, size = 0x200, scoped, tag = 'input window, operand 0, single buffered']
    #allocation3 [shape = 's32[2]{0}', space=sflag, size = 0x8, scoped, tag = 'scoped memory for sh_block.1']
    %8 = vsyncpa [#allocation3], 0
    loop: start=0, step=1, limit=4
    $region2: #{sh_block.1} parent=1 // loop_pre_header
      _
    $region3: #{sh_block.1} parent=1 // loop_header
      %s10 = sphi 0, %s14
      %p11 = scmp.ge.s32.totalorder %s10, 4
      %s17 = sphi 0, %s29
      %s18 = sphi 0, %s25
      %s19 = sphi 0, %s17
      %s20 = sphi 0, %s18
      %s21 = sphi 0, %s19
      %s22 = sphi 0, %s20
      %s30 = sphi 0, %s30
      %s32 = sphi 0, %s30
      %s33 = sphi 0, %s32
      %s47 = sphi 0, %s33
      %s55 = sphi 0, %s57
      %s58 = sphi 0, %s55
      %s59 = sphi 0, %s58
      %s75 = sphi 0, %s59
      %s83 = sphi 0, %s85
      %s86 = sphi 0, %s83
      %s87 = sphi 0, %s86
      %s103 = sphi 0, %s87
      %s111 = sphi 0, %s113
      %s114 = sphi 0, %s111
      %s115 = sphi 0, %s114
      %s131 = sphi 0, %s115
    $region4: #{sh_block.1} parent=1 // loop_header_branch
      %13 = sbr.rel (%p11) target = $region8
    $region5: #{sh_block.1} parent=1 // loop_body
      %s15 = ssub.s32 %s10, 1
      %s16 = ssub.s32 %s10, 2
      %s23 = sadd.s32 1, %s18
      %p24 = scmp.ge.s32.totalorder %s23, 1
      %s25 = scalar_select %p24, 0, %s23
      %s26 = sadd.s32 1, %s17
      %s27 = scalar_select %p24, %s26, %s17
      %p28 = scmp.ge.s32.totalorder %s27, 2
      %s29 = scalar_select %p28, 0, %s27
      %s31 = sadd.s32 %s30, 1
      %p34 = scmp.eq.s32.totalorder %s10, 1
      %p35 = scmp.ne.s32.totalorder %s30, %s32
      %p36 = scmp.eq.s32.totalorder %s10, 0
      %p37 = por %p35, %p36
      %p38 = scmp.ne.s32.totalorder %s30, %s32
      %p39 = scmp.eq.s32.totalorder %s15, 1
      %p40 = por %p38, %p39
      %p41 = scmp.ne.s32.totalorder %s32, %s33
      %p42 = scmp.eq.s32.totalorder %s15, 0
      %p43 = por %p41, %p42
      %p44 = scmp.ne.s32.totalorder %s32, %s33
      %p45 = scmp.eq.s32.totalorder %s16, 1
      %p46 = por %p44, %p45
      %p48 = scmp.ne.s32.totalorder %s33, %s47
      %p49 = scmp.eq.s32.totalorder %s16, 0
      %p50 = por %p48, %p49
      %s51 = ssub.s32 %s17, %s29
      %s52 = ssub.s32 %s18, %s25
      %s53 = sor.u32 %s51, %s52
      %p54 = scmp.eq.s32.totalorder %s53, 0
      %s56 = sadd.s32 %s55, 1
      %s57 = scalar_select %p54, %s55, %s56
      %p60 = pneg %p54
      %p61 = scmp.eq.s32.totalorder %s10, 1
      %p62 = por %p60, %p61
      %p63 = scmp.ne.s32.totalorder %s55, %s58
      %p64 = scmp.eq.s32.totalorder %s10, 0
      %p65 = por %p63, %p64
      %p66 = scmp.ne.s32.totalorder %s55, %s58
      %p67 = scmp.eq.s32.totalorder %s15, 1
      %p68 = por %p66, %p67
      %p69 = scmp.ne.s32.totalorder %s58, %s59
      %p70 = scmp.eq.s32.totalorder %s15, 0
      %p71 = por %p69, %p70
      %p72 = scmp.ne.s32.totalorder %s58, %s59
      %p73 = scmp.eq.s32.totalorder %s16, 1
      %p74 = por %p72, %p73
      %p76 = scmp.ne.s32.totalorder %s59, %s75
      %p77 = scmp.eq.s32.totalorder %s16, 0
      %p78 = por %p76, %p77
      %s79 = ssub.s32 %s17, %s29
      %s80 = ssub.s32 %s18, %s25
      %s81 = sor.u32 %s79, %s80
      %p82 = scmp.eq.s32.totalorder %s81, 0
      %s84 = sadd.s32 %s83, 1
      %s85 = scalar_select %p82, %s83, %s84
      %p88 = pneg %p82
      %p89 = scmp.eq.s32.totalorder %s10, 1
      %p90 = por %p88, %p89
      %p91 = scmp.ne.s32.totalorder %s83, %s86
      %p92 = scmp.eq.s32.totalorder %s10, 0
      %p93 = por %p91, %p92
      %p94 = scmp.ne.s32.totalorder %s83, %s86
      %p95 = scmp.eq.s32.totalorder %s15, 1
      %p96 = por %p94, %p95
      %p97 = scmp.ne.s32.totalorder %s86, %s87
      %p98 = scmp.eq.s32.totalorder %s15, 0
      %p99 = por %p97, %p98
      %p100 = scmp.ne.s32.totalorder %s86, %s87
      %p101 = scmp.eq.s32.totalorder %s16, 1
      %p102 = por %p100, %p101
      %p104 = scmp.ne.s32.totalorder %s87, %s103
      %p105 = scmp.eq.s32.totalorder %s16, 0
      %p106 = por %p104, %p105
      %s107 = ssub.s32 %s17, %s29
      %s108 = ssub.s32 %s18, %s25
      %s109 = sor.u32 %s107, %s108
      %p110 = scmp.eq.s32.totalorder %s109, 0
      %s112 = sadd.s32 %s111, 1
      %s113 = scalar_select %p110, %s111, %s112
      %p116 = pneg %p110
      %p117 = scmp.eq.s32.totalorder %s10, 1
      %p118 = por %p116, %p117
      %p119 = scmp.ne.s32.totalorder %s111, %s114
      %p120 = scmp.eq.s32.totalorder %s10, 0
      %p121 = por %p119, %p120
      %p122 = scmp.ne.s32.totalorder %s111, %s114
      %p123 = scmp.eq.s32.totalorder %s15, 1
      %p124 = por %p122, %p123
      %p125 = scmp.ne.s32.totalorder %s114, %s115
      %p126 = scmp.eq.s32.totalorder %s15, 0
      %p127 = por %p125, %p126
      %p128 = scmp.ne.s32.totalorder %s114, %s115
      %p129 = scmp.eq.s32.totalorder %s16, 1
      %p130 = por %p128, %p129
      %p132 = scmp.ne.s32.totalorder %s115, %s131
      %p133 = scmp.eq.s32.totalorder %s16, 0
      %p134 = por %p132, %p133
      %p135 = scmp.le.s32.totalorder 1, %s10
      %p136 = scmp.lt.s32.totalorder %s10, 3
      %p137 = pnand %p135, %p136
      %p138 = pneg %p137
      // Predicated region
      $region9: #{sh_block.1} parent=5 // pred_check
        _
      $region10: #{sh_block.1} parent=5 // pred_check_branch
        %140 = sbr.rel (%p137) target = $region12
      $region11: #{sh_block.1} parent=5 // pred_region
        %s141 = ssub.s32 %s10, 1
        // Predicated region
        $region13: #{sh_block.1} parent=11 // pred_check
          %p142 = pneg %p43
        $region14: #{sh_block.1} parent=11 // pred_check_branch
          %144 = sbr.rel (%p142) target = $region16
        $region15: #{sh_block.1} parent=11 // pred_region
          %s146 = ssub.s32 16, 16
          %147 = vsyncadd [#allocation3], %s146
          %s149 = sshll.u32 %s0, 4
          %s150 = int_to_ptr.vmem [resolvable:$true] %s149
          %152 = dma.vmem_to_smem %s150, 16, [#allocation2], [#allocation3]
        $region16: #{sh_block.1} parent=11 // pred_fallthru
          _
      $region12: #{sh_block.1} parent=5 // pred_fallthru
        _
      %p153 = scmp.lt.s32.totalorder %s10, 2
      // Predicated region
      $region17: #{sh_block.1} parent=5 // pred_check
        %p154 = pneg %p153
      $region18: #{sh_block.1} parent=5 // pred_check_branch
        %156 = sbr.rel (%p154) target = $region20
      $region19: #{sh_block.1} parent=5 // pred_region
        // Predicated region
        $region21: #{sh_block.1} parent=19 // pred_check
          %p157 = pneg %p65
        $region22: #{sh_block.1} parent=19 // pred_check_branch
          %159 = sbr.rel (%p157) target = $region24
        $region23: #{sh_block.1} parent=19 // pred_region
          %p160 = scmp.lt.s32.totalorder %s17, 1
          %s161 = scalar_select %p160, %s17, 1
          %p162 = scmp.lt.s32.totalorder %s18, 0
          %s163 = scalar_select %p162, %s18, 0
          %s164 = sadd.s32 %s163, %s161
          %s165 = smul.addr %s164, 8
          %s166 = scalar_lea.vmem %s1, %s165
        $region24: #{sh_block.1} parent=19 // pred_fallthru
          _
        // Predicated region
        $region25: #{sh_block.1} parent=19 // pred_check
          %p167 = pneg %p93
        $region26: #{sh_block.1} parent=19 // pred_check_branch
          %169 = sbr.rel (%p167) target = $region28
        $region27: #{sh_block.1} parent=19 // pred_region
          %p170 = scmp.lt.s32.totalorder %s17, 1
          %s171 = scalar_select %p170, %s17, 1
          %p172 = scmp.lt.s32.totalorder %s18, 0
          %s173 = scalar_select %p172, %s18, 0
          %s174 = sadd.s32 %s173, %s171
          %s175 = smul.addr %s174, 4
          %s176 = scalar_lea.vmem %s2, %s175
        $region28: #{sh_block.1} parent=19 // pred_fallthru
          _
      $region20: #{sh_block.1} parent=5 // pred_fallthru
        _
      %p177 = scmp.le.s32.totalorder 1, %s10
      %p178 = scmp.lt.s32.totalorder %s10, 3
      %p179 = pnand %p177, %p178
      %p180 = pneg %p179
      // Predicated region
      $region29: #{sh_block.1} parent=5 // pred_check
        _
      $region30: #{sh_block.1} parent=5 // pred_check_branch
        %182 = sbr.rel (%p179) target = $region32
      $region31: #{sh_block.1} parent=5 // pred_region
        %s183 = ssub.s32 %s10, 1
        // Predicated region
        $region33: #{sh_block.1} parent=31 // pred_check
          %p184 = pneg %p43
        $region34: #{sh_block.1} parent=31 // pred_check_branch
          %186 = sbr.rel (%p184) target = $region36
        $region35: #{sh_block.1} parent=31 // pred_region
          %187 = dma.done [#allocation3], 16
        $region36: #{sh_block.1} parent=31 // pred_fallthru
          _
        %188 = sfence
        %p189 = pneg %p43
        %p190 = pneg %p40
        %p191 = scmp.lt.s32.totalorder %s19, 1
        %s192 = scalar_select %p191, %s19, 1
        %p193 = scmp.lt.s32.totalorder %s20, 0
        %s194 = scalar_select %p193, %s20, 0
        %s195 = sadd.s32 %s194, %s192
        %s196 = smul.addr %s195, 8
        %s197 = scalar_lea.vmem %s1, %s196
        %p198 = pneg %p71
        %p199 = pneg %p68
        %p200 = scmp.lt.s32.totalorder %s19, 1
        %s201 = scalar_select %p200, %s19, 1
        %p202 = scmp.lt.s32.totalorder %s20, 0
        %s203 = scalar_select %p202, %s20, 0
        %s204 = sadd.s32 %s203, %s201
        %s205 = smul.addr %s204, 4
        %s206 = scalar_lea.vmem %s2, %s205
        %p207 = pneg %p99
        %p208 = pneg %p96
        %p209 = pneg %p127
        %p210 = pneg %p124
        %p211 = scmp.lt.s32.totalorder %s19, 1
        %s212 = scalar_select %p211, %s19, 1
        %p213 = scmp.lt.s32.totalorder %s20, 0
        %s214 = scalar_select %p213, %s20, 0
        %s215 = sadd.s32 %s214, %s212
        %s216 = smul.addr %s215, 4
        %s217 = scalar_lea.vmem %s3, %s216
        %p218 = scmp.lt.s32.totalorder %s19, 1
        %s219 = scalar_select %p218, %s19, 1
        %p220 = scmp.lt.s32.totalorder %s20, 0
        %s221 = scalar_select %p220, %s20, 0
        %s222 = sadd.s32 %s221, %s219
        %s223 = smul.addr %s222, 8
        %s224 = scalar_lea.vmem %s1, %s223
        %p225 = scmp.lt.s32.totalorder %s19, 1
        %s226 = scalar_select %p225, %s19, 1
        %p227 = scmp.lt.s32.totalorder %s20, 0
        %s228 = scalar_select %p227, %s20, 0
        %s229 = sadd.s32 %s228, %s226
        %s230 = smul.addr %s229, 4
        %s231 = scalar_lea.vmem %s2, %s230
        %p232 = scmp.lt.s32.totalorder %s19, 1
        %s233 = scalar_select %p232, %s19, 1
        %p234 = scmp.lt.s32.totalorder %s20, 0
        %s235 = scalar_select %p234, %s20, 0
        %s236 = sadd.s32 %s235, %s233
        %s237 = smul.addr %s236, 4
        %s238 = scalar_lea.vmem %s3, %s237
        %s239 = sld [smem:[#allocation2]]
        %s240 = sld [smem:[#allocation2 + $0x1]]
        %v241 = vld [vmem:[%s224] sm:$0xff]
        %v242 = vsub.f32 1.0, %v241
        %v244 = vrot.slane %v241, 4
        %v246 = vmul.f32 %v242, %v244
        %v247 = vstv %s239
        %v248 = vmul.f32 %v247, %v246
        %v249 = vstv %s240
        %v250 = vadd.f32 %v248, %v249
        %v251 = vxor.u32 %v250, 2147483648
        %v252 = vmul.f32 %v251, 1.442695
        %v253 = vpow.pop %v252
        %v254 = vadd.f32 %v253, 1.0
        %v255 = vrcp.pop %v254
        %v256 = vmul.f32 1.0, %v255
        %vm257 = vcmask 519168
        %v258 = vsel %vm257, %v256, -inf
        %v259 = vrot.slane %v258, 4
        %v260 = vmax.f32 %v258, %v259
        %v261 = vrot.slane %v260, 2
        %v262 = vmax.f32 %v260, %v261
        %v263 = vrot.slane %v262, 1
        %v264 = vmax.f32 %v262, %v263
        %v265 = vsel %vm257, %v256, 0.0
        %v266 = vrot.slane %v265, 4
        %v267 = vadd.f32 %v265, %v266
        %v268 = vrot.slane %v267, 2
        %v269 = vadd.f32 %v267, %v268
        %v270 = vrot.slane %v269, 1
        %v271 = vadd.f32 %v269, %v270
        %v272 = vmul.f32 %v271, 0.25
        %v273 = vadd.f32 %v264, %v272
        %v274 = vld [vmem:[%s231] sm:$0xf]
        %v275 = vmul.f32 %v274, %v273
        %276 = vst.msk [vmem:[%s238] sm:$0xf] %vm257, %v275
        %p277 = scmp.lt.s32.totalorder %s19, 1
        %s278 = scalar_select %p277, %s19, 1
        %p279 = scmp.lt.s32.totalorder %s20, 0
        %s280 = scalar_select %p279, %s20, 0
        %s281 = sadd.s32 %s280, %s278
        %s282 = smul.addr %s281, 4
        %s283 = scalar_lea.vmem %s3, %s282
        // Predicated region
        $region37: #{sh_block.1} parent=31 // pred_check
          %p284 = pneg %p124
        $region38: #{sh_block.1} parent=31 // pred_check_branch
          %286 = sbr.rel (%p284) target = $region40
        $region39: #{sh_block.1} parent=31 // pred_region
          _
        $region40: #{sh_block.1} parent=31 // pred_fallthru
          _
      $region32: #{sh_block.1} parent=5 // pred_fallthru
        _
      %p287 = scmp.le.s32.totalorder 2, %s10
      // Predicated region
      $region41: #{sh_block.1} parent=5 // pred_check
        %p288 = pneg %p287
      $region42: #{sh_block.1} parent=5 // pred_check_branch
        %290 = sbr.rel (%p288) target = $region44
      $region43: #{sh_block.1} parent=5 // pred_region
        %s291 = ssub.s32 %s10, 2
        // Predicated region
        $region45: #{sh_block.1} parent=43 // pred_check
          %p292 = pneg %p130
        $region46: #{sh_block.1} parent=43 // pred_check_branch
          %294 = sbr.rel (%p292) target = $region48
        $region47: #{sh_block.1} parent=43 // pred_region
          %p295 = scmp.lt.s32.totalorder %s21, 1
          %s296 = scalar_select %p295, %s21, 1
          %p297 = scmp.lt.s32.totalorder %s22, 0
          %s298 = scalar_select %p297, %s22, 0
          %s299 = sadd.s32 %s298, %s296
          %s300 = smul.addr %s299, 4
          %s301 = scalar_lea.vmem %s3, %s300
        $region48: #{sh_block.1} parent=43 // pred_fallthru
          _
      $region44: #{sh_block.1} parent=5 // pred_fallthru
        _
    $region6: #{sh_block.1} parent=1 // loop_footer
      %s14 = sadd.s32 1, %s10
    $region7: #{sh_block.1} parent=1 // loop_footer_branch
      %9 = sbr.rel target = $region3
    $region8: #{sh_block.1} parent=1 // loop_exit
      _
    %302 = vsyncpa [#allocation3], 1
    %s303 = scalar_lea.sflag [#allocation3], 1
    %304 = vsyncpa %s303, 1

</llo_original>
